<compile_context>
chip_gen: v7x
topology: tpu7x:2x2x1
jax: 0.10.0
libtpu: 0.0.40
codegen_flags: <defaults>
</compile_context>

<pallas_src>
import functools

import jax
import jax.numpy as jnp
from jax.experimental import pallas as pl
from jax.experimental.pallas import tpu as pltpu

_EPS = 1e-20


# ---------------------------------------------------------------------------
# Pallas kernel: one batch element per grid step.
# ---------------------------------------------------------------------------
def _diff_selection_kernel(keep_k, temp_ref, x_ref, g_ref, w1_ref, w2_ref,
                           xm_ref, mask_ref):
    """Fused 1x1-conv MLP + gumbel-softmax + hard top-k selection.

    x_ref : (C, HW)      channels-first, HW on the lane axis (lane-dense)
    g_ref : (1, HW)      precomputed gumbel noise  -log(-log(U+eps)+eps)
    w1_ref: (hidden, C)  conv1 weight (1x1, bias=False)
    w2_ref: (1, hidden)  conv2 weight (1x1, bias=False)
    """
    x = x_ref[...]                                                  # (C, HW)

    # conv1 (1x1) + ReLU: (hidden, C) @ (C, HW) on the MXU, f32 accumulation.
    h = jnp.maximum(
        jnp.dot(w1_ref[...], x, preferred_element_type=jnp.float32), 0.0)

    # conv2 (1x1): one logit per pixel, lane-dense (1, HW).
    logits = jnp.dot(w2_ref[...], h, preferred_element_type=jnp.float32)

    # Gumbel-softmax over the flattened spatial axis.
    inv_t = 1.0 / temp_ref[0]
    z = (logits + g_ref[...]) * inv_t
    z = z - jnp.max(z, axis=-1, keepdims=True)
    e = jnp.exp(z)
    # EUP reciprocal instead of a VPU divide (harmless to outputs: only the
    # *ordering* of y feeds the hard mask, and ordering is preserved).
    y = e * pl.reciprocal(jnp.sum(e, axis=-1, keepdims=True), approx=True)

    # Hard top-k mask (== torch.topk + scatter absent ties): rank each pixel
    # by counting how many pixels have a strictly larger softmax value, then
    # keep ranks < k.  Fully vectorized: sublane broadcast + XLU transpose +
    # sublane-axis reduce, no loops and no skinny transposes.
    hw = y.shape[-1]
    y_rows = jnp.broadcast_to(y, (hw, hw))          # y_rows[i, j] = y[j]
    y_cols = y_rows.T                               # y_cols[i, j] = y[i]
    n_greater = jnp.sum((y_cols > y_rows).astype(jnp.float32),
                        axis=0, keepdims=True)      # (1, HW)
    mask = (n_greater < jnp.float32(keep_k)).astype(jnp.float32)

    # Straight-through mask: forward value of (mask - y).detach() + y == mask.
    mask_ref[...] = mask
    xm_ref[...] = logits * mask


# ---------------------------------------------------------------------------
# Wrapper: layout plumbing + pallas_call.
# ---------------------------------------------------------------------------
def diff_selection_forward(x_nchw, w1, w2, gumbel_temperature, gumbel_noise,
                           topk_percent):
    """x_nchw: (B, C, H, W) f32; w1: (hidden, C); w2: (1, hidden);
    gumbel_noise: (B, 1, H, W) precomputed -log(-log(U+eps)+eps)."""
    B, C, H, W = x_nchw.shape
    HW = H * W
    hidden = w1.shape[0]
    keep_k = max(int(topk_percent * H * W), 1)

    # Channels-first lane-dense layout: plain reshapes of NCHW, no transposes,
    # no duplicate copies of the input.
    x_flat = jnp.asarray(x_nchw, jnp.float32).reshape(B, C, HW)
    g_flat = jnp.asarray(gumbel_noise, jnp.float32).reshape(B, 1, HW)
    temp_arr = jnp.asarray(gumbel_temperature, jnp.float32).reshape(1)
    w1f = jnp.asarray(w1, jnp.float32)
    w2f = jnp.asarray(w2, jnp.float32).reshape(1, hidden)

    # TODO(synk): at large H*W the (HW, HW) rank-count intermediate must be
    # tiled (or replaced by iterative k-max extraction) and vmem_limit_bytes
    # raised; at 16x16 it is 256 KB and trivially fits VMEM.
    xm, mask = pl.pallas_call(
        functools.partial(_diff_selection_kernel, keep_k),
        out_shape=(jax.ShapeDtypeStruct((B, 1, HW), jnp.float32),
                   jax.ShapeDtypeStruct((B, 1, HW), jnp.float32)),
        grid=(B,),
        in_specs=[
            pl.BlockSpec(memory_space=pltpu.MemorySpace.SMEM),    # temperature
            pl.BlockSpec((None, C, HW), lambda b: (b, 0, 0)),     # x
            pl.BlockSpec((None, 1, HW), lambda b: (b, 0, 0)),     # gumbel noise
            pl.BlockSpec((hidden, C), lambda b: (0, 0)),          # conv1 W
            pl.BlockSpec((1, hidden), lambda b: (0, 0)),          # conv2 W
        ],
        out_specs=(pl.BlockSpec((None, 1, HW), lambda b: (b, 0, 0)),
                   pl.BlockSpec((None, 1, HW), lambda b: (b, 0, 0))),
        # One batch element per step; 'parallel' lets dual-TC v7x split the
        # batch (on single-TC v5e/v6e the extra step costs only ~0.35 us).
        compiler_params=pltpu.CompilerParams(
            dimension_semantics=("parallel",)),
    )(temp_arr, x_flat, g_flat, w1f, w2f)

    return xm.reshape(B, 1, H, W), mask.reshape(B, 1, H, W)


# ---------------------------------------------------------------------------
# Gumbel-noise sampling (torch.rand + double-log) -- done host-side with
# jax.random so kernel and reference consume identical noise.
# ---------------------------------------------------------------------------
def sample_gumbel(key, shape, eps=_EPS):
    u = jax.random.uniform(key, shape, jnp.float32)
    return -jnp.log(-jnp.log(u + eps) + eps)


# ---------------------------------------------------------------------------
# Pure-JAX reference mirroring the (intended) PyTorch forward, for validation.
# ---------------------------------------------------------------------------
def reference_diff_selection(x, w1, w2, temperature, gumbel_noise,
                             topk_percent):
    B, C, H, W = x.shape
    HW = H * W
    conv = lambda inp, w: jnp.einsum('bchw,oc->bohw', inp, w)
    hdn = jax.nn.relu(conv(x, w1))
    logits = conv(hdn, w2)                                    # (B, 1, H, W)
    z = (logits + gumbel_noise).reshape(B, 1, HW) / temperature
    y = jax.nn.softmax(z, axis=2)
    keep_k = max(int(topk_percent * H * W), 1)
    _, idx = jax.lax.top_k(y.reshape(B, HW), keep_k)          # torch.topk
    hard = jnp.zeros((B, HW), jnp.float32)
    hard = hard.at[jnp.arange(B)[:, None], idx].set(1.0)      # scatter_ 1.0
    hard = hard.reshape(B, 1, H, W)
    y4 = y.reshape(B, 1, H, W)
    st_mask = jax.lax.stop_gradient(hard - y4) + y4           # value == hard
    return logits * st_mask, st_mask


if __name__ == "__main__":
    key = jax.random.PRNGKey(0)
    B, ch, hidden_ch, H, W = 2, 4, 32, 16, 16     # small shapes per the module
    topk_percent = 0.1                            # keep_top_num = 25
    gumbel_temperature = 0.5
    k0, k1, k2, k3 = jax.random.split(key, 4)

    x = jax.random.normal(k0, (B, ch, H, W), jnp.float32)

    def conv_init(k, cout, cin):                  # 1x1-conv weight init (no bias)
        bound = 1.0 / jnp.sqrt(jnp.float32(cin))
        return jax.random.uniform(k, (cout, cin), jnp.float32, -bound, bound)

    w1 = conv_init(k1, hidden_ch, ch)             # conv1: ch -> hidden_ch
    w2 = conv_init(k2, 1, hidden_ch)              # conv2: hidden_ch -> 1
    gnoise = sample_gumbel(k3, (B, 1, H, W))      # torch.rand -> gumbel noise

    xm, mask = diff_selection_forward(x, w1, w2, gumbel_temperature, gnoise,
                                      topk_percent)
    xm = jax.block_until_ready(xm)
    mask = jax.block_until_ready(mask)

    xm_ref, mask_ref = reference_diff_selection(x, w1, w2, gumbel_temperature,
                                                gnoise, topk_percent)

    keep_k = max(int(topk_percent * H * W), 1)
    assert xm.shape == (B, 1, H, W) and mask.shape == (B, 1, H, W)
    assert jnp.allclose(mask, mask_ref, rtol=1e-4, atol=1e-5)
    assert jnp.allclose(xm, xm_ref, rtol=1e-4, atol=1e-5)
    assert bool(jnp.all((mask == 0.0) | (mask == 1.0)))
    assert bool(jnp.all(jnp.sum(mask, axis=(1, 2, 3)) == keep_k))

    print("KERNEL_OK")
</pallas_src>

<mosaic_0001>
module attributes {stable_mosaic.version = 11 : i64} {
  func.func @_diff_selection_kernel(%arg0: i32, %arg1: memref<1xf32, #tpu.memory_space<smem>>, %arg2: memref<1x4x256xf32, #tpu.memory_space<vmem>>, %arg3: memref<1x1x256xf32, #tpu.memory_space<vmem>>, %arg4: memref<32x4xf32, #tpu.memory_space<vmem>>, %arg5: memref<1x32xf32, #tpu.memory_space<vmem>>, %arg6: memref<1x1x256xf32, #tpu.memory_space<vmem>>, %arg7: memref<1x1x256xf32, #tpu.memory_space<vmem>>) attributes {dimension_semantics = [#tpu.dimension_semantics<parallel>], iteration_bounds = array<i64: 2>, scalar_prefetch = 0 : i64, scratch_operands = 0 : i64, tpu.core_type = #tpu.core_type<tc>, window_params = [{transform_indices = @transform_0, window_bounds = array<i64: 1>}, {transform_indices = @transform_1, window_bounds = array<i64: 1, 4, 256>}, {transform_indices = @transform_2, window_bounds = array<i64: 1, 1, 256>}, {pipeline_mode = #tpu.pipeline_mode<synchronous>, transform_indices = @transform_3, window_bounds = array<i64: 32, 4>}, {pipeline_mode = #tpu.pipeline_mode<synchronous>, transform_indices = @transform_4, window_bounds = array<i64: 1, 32>}, {transform_indices = @transform_5, window_bounds = array<i64: 1, 1, 256>}, {transform_indices = @transform_6, window_bounds = array<i64: 1, 1, 256>}]} {
    %c0 = arith.constant 0 : index
    %c0_0 = arith.constant 0 : index
    %c0_1 = arith.constant 0 : index
    %0 = vector.load %arg2[%c0, %c0_0, %c0_1] : memref<1x4x256xf32, #tpu.memory_space<vmem>>, vector<1x4x256xf32>
    %1 = vector.shape_cast %0 : vector<1x4x256xf32> to vector<4x256xf32>
    %c0_2 = arith.constant 0 : index
    %c0_3 = arith.constant 0 : index
    %2 = vector.load %arg4[%c0_2, %c0_3] : memref<32x4xf32, #tpu.memory_space<vmem>>, vector<32x4xf32>
    %cst = arith.constant dense<0.000000e+00> : vector<32x256xf32>
    %3 = tpu.matmul %2, %1, %cst {dimension_numbers = #tpu.dot_dimension_numbers<[1], [0], [0], [1], [0, 0, 1, 1], [], []>} : vector<32x4xf32>, vector<4x256xf32>, vector<32x256xf32> -> vector<32x256xf32>
    %cst_4 = arith.constant 0.000000e+00 : f32
    %4 = vector.broadcast %cst_4 : f32 to vector<32x256xf32>
    %5 = arith.maximumf %3, %4 : vector<32x256xf32>
    %c0_5 = arith.constant 0 : index
    %c0_6 = arith.constant 0 : index
    %6 = vector.load %arg5[%c0_5, %c0_6] : memref<1x32xf32, #tpu.memory_space<vmem>>, vector<1x32xf32>
    %cst_7 = arith.constant dense<0.000000e+00> : vector<1x256xf32>
    %7 = tpu.matmul %6, %5, %cst_7 {dimension_numbers = #tpu.dot_dimension_numbers<[1], [0], [0], [1], [0, 0, 1, 1], [], []>} : vector<1x32xf32>, vector<32x256xf32>, vector<1x256xf32> -> vector<1x256xf32>
    %c0_8 = arith.constant 0 : index
    %8 = memref.load %arg1[%c0_8] : memref<1xf32, #tpu.memory_space<smem>>
    %cst_9 = arith.constant 1.000000e+00 : f32
    %9 = arith.divf %cst_9, %8 : f32
    %c0_10 = arith.constant 0 : index
    %c0_11 = arith.constant 0 : index
    %c0_12 = arith.constant 0 : index
    %10 = vector.load %arg3[%c0_10, %c0_11, %c0_12] : memref<1x1x256xf32, #tpu.memory_space<vmem>>, vector<1x1x256xf32>
    %11 = vector.shape_cast %10 : vector<1x1x256xf32> to vector<1x256xf32>
    %12 = arith.addf %7, %11 : vector<1x256xf32>
    %13 = vector.broadcast %9 : f32 to vector<1x256xf32>
    %14 = arith.mulf %12, %13 : vector<1x256xf32>
    %cst_13 = arith.constant dense<0xFF800000> : vector<1xf32>
    %15 = vector.multi_reduction <maximumf>, %14, %cst_13 [1] : vector<1x256xf32> to vector<1xf32>
    %16 = vector.shape_cast %15 : vector<1xf32> to vector<1x1xf32>
    %17 = vector.broadcast %16 : vector<1x1xf32> to vector<1x256xf32>
    %18 = arith.subf %14, %17 : vector<1x256xf32>
    %19 = math.exp %18 : vector<1x256xf32>
    %cst_14 = arith.constant dense<0.000000e+00> : vector<1xf32>
    %20 = vector.multi_reduction <add>, %19, %cst_14 [1] : vector<1x256xf32> to vector<1xf32>
    %21 = vector.shape_cast %20 : vector<1xf32> to vector<1x1xf32>
    %22 = tpu.reciprocal %21 {approx = true} : vector<1x1xf32> -> vector<1x1xf32>
    %23 = vector.broadcast %22 : vector<1x1xf32> to vector<1x256xf32>
    %24 = arith.mulf %19, %23 : vector<1x256xf32>
    %25 = vector.shape_cast %24 : vector<1x256xf32> to vector<1x256xf32>
    %26 = vector.broadcast %25 : vector<1x256xf32> to vector<256x256xf32>
    %27 = tpu.transpose %26, [1, 0] : vector<256x256xf32> -> vector<256x256xf32>
    %28 = arith.cmpf ogt, %27, %26 : vector<256x256xf32>
    %29 = arith.extui %28 : vector<256x256xi1> to vector<256x256xi32>
    %30 = arith.sitofp %29 : vector<256x256xi32> to vector<256x256xf32>
    %cst_15 = arith.constant dense<0.000000e+00> : vector<256xf32>
    %31 = vector.multi_reduction <add>, %30, %cst_15 [0] : vector<256x256xf32> to vector<256xf32>
    %32 = vector.shape_cast %31 : vector<256xf32> to vector<1x256xf32>
    %cst_16 = arith.constant 2.500000e+01 : f32
    %33 = vector.broadcast %cst_16 : f32 to vector<1x256xf32>
    %34 = arith.cmpf olt, %32, %33 : vector<1x256xf32>
    %35 = arith.extui %34 : vector<1x256xi1> to vector<1x256xi32>
    %36 = arith.sitofp %35 : vector<1x256xi32> to vector<1x256xf32>
    %c0_17 = arith.constant 0 : index
    %c0_18 = arith.constant 0 : index
    %c0_19 = arith.constant 0 : index
    %37 = vector.load %arg7[%c0_17, %c0_18, %c0_19] : memref<1x1x256xf32, #tpu.memory_space<vmem>>, vector<1x1x256xf32>
    %38 = vector.shape_cast %37 : vector<1x1x256xf32> to vector<1x256xf32>
    %39 = vector.shape_cast %36 : vector<1x256xf32> to vector<1x1x256xf32>
    tpu.vector_store %arg7[%c0_17, %c0_18, %c0_19], %39 {strides = array<i32>} : memref<1x1x256xf32, #tpu.memory_space<vmem>>, vector<1x1x256xf32>,
    %40 = arith.mulf %7, %36 : vector<1x256xf32>
    %c0_20 = arith.constant 0 : index
    %c0_21 = arith.constant 0 : index
    %c0_22 = arith.constant 0 : index
    %41 = vector.load %arg6[%c0_20, %c0_21, %c0_22] : memref<1x1x256xf32, #tpu.memory_space<vmem>>, vector<1x1x256xf32>
    %42 = vector.shape_cast %41 : vector<1x1x256xf32> to vector<1x256xf32>
    %43 = vector.shape_cast %40 : vector<1x256xf32> to vector<1x1x256xf32>
    tpu.vector_store %arg6[%c0_20, %c0_21, %c0_22], %43 {strides = array<i32>} : memref<1x1x256xf32, #tpu.memory_space<vmem>>, vector<1x1x256xf32>,
    return
  }
  func.func @transform_0(%arg0: i32) -> i32 {
    %c0_i32 = arith.constant 0 : i32
    %c0_i32_0 = arith.constant 0 : i32
    return %c0_i32 : i32
  }
  func.func @transform_1(%arg0: i32) -> (i32, i32, i32) {
    %c0_i32 = arith.constant 0 : i32
    %c0_i32_0 = arith.constant 0 : i32
    %c0_i32_1 = arith.constant 0 : i32
    return %arg0, %c0_i32, %c0_i32_0 : i32, i32, i32
  }
  func.func @transform_2(%arg0: i32) -> (i32, i32, i32) {
    %c0_i32 = arith.constant 0 : i32
    %c0_i32_0 = arith.constant 0 : i32
    %c0_i32_1 = arith.constant 0 : i32
    return %arg0, %c0_i32, %c0_i32_0 : i32, i32, i32
  }
  func.func @transform_3(%arg0: i32) -> (i32, i32) {
    %c0_i32 = arith.constant 0 : i32
    %c0_i32_0 = arith.constant 0 : i32
    %c0_i32_1 = arith.constant 0 : i32
    return %c0_i32, %c0_i32_0 : i32, i32
  }
  func.func @transform_4(%arg0: i32) -> (i32, i32) {
    %c0_i32 = arith.constant 0 : i32
    %c0_i32_0 = arith.constant 0 : i32
    %c0_i32_1 = arith.constant 0 : i32
    return %c0_i32, %c0_i32_0 : i32, i32
  }
  func.func @transform_5(%arg0: i32) -> (i32, i32, i32) {
    %c0_i32 = arith.constant 0 : i32
    %c0_i32_0 = arith.constant 0 : i32
    %c0_i32_1 = arith.constant 0 : i32
    return %arg0, %c0_i32, %c0_i32_0 : i32, i32, i32
  }
  func.func @transform_6(%arg0: i32) -> (i32, i32, i32) {
    %c0_i32 = arith.constant 0 : i32
    %c0_i32_0 = arith.constant 0 : i32
    %c0_i32_1 = arith.constant 0 : i32
    return %arg0, %c0_i32, %c0_i32_0 : i32, i32, i32
  }
}

</mosaic_0001>

<llo_original>
// kernel: tpu_custom_call.1
$region0: #{tpu_custom_call.1}
  #allocation0 [shape = 'u32[]', space=smem, size = 0x4, offset = 0x4, fixed_abs, tag = 'smem constant byte address 0x4 - core index']
  #allocation1 [shape = 'u32[144,128]{1,0:T(1,128)}', space=vmem, size = 0x12000, scoped, tag = 'internal scratch']
  #allocation2 [shape = 'f32[1]{0:T(128)S(6)}', space=smem, size = 0x200, scoped, tag = 'scoped memory for tpu_custom_call.1']
  %s0 = inlined_call_operand.<no memory space> [shape: f32[1], index: 0, kind: input, shape index: {}]
  %s1 = inlined_call_operand.vmem [shape: f32[2,4,256], index: 1, kind: input, shape index: {}]
  %s2 = inlined_call_operand.vmem [shape: f32[2,1,256], index: 2, kind: input, shape index: {}]
  %s3 = inlined_call_operand.vmem [shape: f32[32,4], index: 3, kind: input, shape index: {}]
  %s4 = inlined_call_operand.vmem [shape: f32[1,32], index: 4, kind: input, shape index: {}]
  %s5 = inlined_call_operand.hbm [shape: f32[2,1,256], index: 5, kind: output, shape index: {0}]
  %s6 = inlined_call_operand.hbm [shape: f32[2,1,256], index: 6, kind: output, shape index: {1}]
  %7 = xla_tuple %s5, %s6
  %s8 = sld [smem:[#allocation0]]
  $region61: #{tpu_custom_call.1} parent=0
    _
  %s10 = ssub.s32 1, %s8
  %s11 = scalar_select 0, %s10, %s8
  %12 = sst [smem:[#allocation2]] %s0
  $region1: #{tpu_custom_call.1} parent=0
    #allocation3 [shape = 'u8[2048]{0}', space=vmem, size = 0x800, scoped, tag = 'output window, operand 0']
    #allocation4 [shape = 's32[2]{0}', space=sflag, size = 0x8, scoped, tag = 'scoped memory for tpu_custom_call.1']
    #allocation5 [shape = 'u8[2048]{0}', space=vmem, size = 0x800, scoped, tag = 'output window, operand 1']
    #allocation6 [shape = 's32[2]{0}', space=sflag, size = 0x8, scoped, tag = 'scoped memory for tpu_custom_call.1']
    %13 = vsyncpa [#allocation4], 0
    %s14 = scalar_lea.sflag [#allocation4], 1
    %15 = vsyncpa %s14, 0
    %16 = vsyncpa [#allocation6], 0
    %s17 = scalar_lea.sflag [#allocation6], 1
    %18 = vsyncpa %s17, 0
    loop: start=0, step=1, limit=4
    $region2: #{tpu_custom_call.1} parent=1 // loop_pre_header
      _
    $region3: #{tpu_custom_call.1} parent=1 // loop_header
      %s20 = sphi 0, %s24
      %p21 = scmp.ge.s32.totalorder %s20, 4
      %s28 = sphi 0, %s28
      %s30 = sphi 0, %s28
      %s31 = sphi 0, %s30
      %s45 = sphi 0, %s31
      %s51 = sphi 0, %s53
      %s54 = sphi 0, %s51
      %s55 = sphi 0, %s54
      %s71 = sphi 0, %s55
      %s77 = sphi 0, %s79
      %s80 = sphi 0, %s77
      %s81 = sphi 0, %s80
      %s97 = sphi 0, %s81
      %s101 = sphi 0, %s101
      %s103 = sphi 0, %s101
      %s104 = sphi 0, %s103
      %s118 = sphi 0, %s104
      %s122 = sphi 0, %s122
      %s124 = sphi 0, %s122
      %s125 = sphi 0, %s124
      %s139 = sphi 0, %s125
      %s145 = sphi 0, %s147
      %s148 = sphi 0, %s145
      %s149 = sphi 0, %s148
      %s165 = sphi 0, %s149
      %s171 = sphi 0, %s173
      %s174 = sphi 0, %s171
      %s175 = sphi 0, %s174
      %s191 = sphi 0, %s175
    $region4: #{tpu_custom_call.1} parent=1 // loop_header_branch
      %23 = sbr.rel (%p21) target = $region8
    $region5: #{tpu_custom_call.1} parent=1 // loop_body
      %s25 = ssub.s32 %s20, 1
      %s26 = ssub.s32 %s20, 2
      %s27 = sadd.s32 %s20, 1
      %s29 = sadd.s32 %s28, 1
      %p32 = scmp.eq.s32.totalorder %s20, 1
      %p33 = scmp.ne.s32.totalorder %s28, %s30
      %p34 = scmp.eq.s32.totalorder %s20, 0
      %p35 = por %p33, %p34
      %p36 = scmp.ne.s32.totalorder %s28, %s30
      %p37 = scmp.eq.s32.totalorder %s25, 1
      %p38 = por %p36, %p37
      %p39 = scmp.ne.s32.totalorder %s30, %s31
      %p40 = scmp.eq.s32.totalorder %s25, 0
      %p41 = por %p39, %p40
      %p42 = scmp.ne.s32.totalorder %s30, %s31
      %p43 = scmp.eq.s32.totalorder %s26, 1
      %p44 = por %p42, %p43
      %p46 = scmp.ne.s32.totalorder %s31, %s45
      %p47 = scmp.eq.s32.totalorder %s26, 0
      %p48 = por %p46, %p47
      %s49 = ssub.s32 %s20, %s27
      %p50 = scmp.eq.s32.totalorder %s49, 0
      %s52 = sadd.s32 %s51, 1
      %s53 = scalar_select %p50, %s51, %s52
      %p56 = pneg %p50
      %p57 = scmp.eq.s32.totalorder %s20, 1
      %p58 = por %p56, %p57
      %p59 = scmp.ne.s32.totalorder %s51, %s54
      %p60 = scmp.eq.s32.totalorder %s20, 0
      %p61 = por %p59, %p60
      %p62 = scmp.ne.s32.totalorder %s51, %s54
      %p63 = scmp.eq.s32.totalorder %s25, 1
      %p64 = por %p62, %p63
      %p65 = scmp.ne.s32.totalorder %s54, %s55
      %p66 = scmp.eq.s32.totalorder %s25, 0
      %p67 = por %p65, %p66
      %p68 = scmp.ne.s32.totalorder %s54, %s55
      %p69 = scmp.eq.s32.totalorder %s26, 1
      %p70 = por %p68, %p69
      %p72 = scmp.ne.s32.totalorder %s55, %s71
      %p73 = scmp.eq.s32.totalorder %s26, 0
      %p74 = por %p72, %p73
      %s75 = ssub.s32 %s20, %s27
      %p76 = scmp.eq.s32.totalorder %s75, 0
      %s78 = sadd.s32 %s77, 1
      %s79 = scalar_select %p76, %s77, %s78
      %p82 = pneg %p76
      %p83 = scmp.eq.s32.totalorder %s20, 1
      %p84 = por %p82, %p83
      %p85 = scmp.ne.s32.totalorder %s77, %s80
      %p86 = scmp.eq.s32.totalorder %s20, 0
      %p87 = por %p85, %p86
      %p88 = scmp.ne.s32.totalorder %s77, %s80
      %p89 = scmp.eq.s32.totalorder %s25, 1
      %p90 = por %p88, %p89
      %p91 = scmp.ne.s32.totalorder %s80, %s81
      %p92 = scmp.eq.s32.totalorder %s25, 0
      %p93 = por %p91, %p92
      %p94 = scmp.ne.s32.totalorder %s80, %s81
      %p95 = scmp.eq.s32.totalorder %s26, 1
      %p96 = por %p94, %p95
      %p98 = scmp.ne.s32.totalorder %s81, %s97
      %p99 = scmp.eq.s32.totalorder %s26, 0
      %p100 = por %p98, %p99
      %s102 = sadd.s32 %s101, 1
      %p105 = scmp.eq.s32.totalorder %s20, 1
      %p106 = scmp.ne.s32.totalorder %s101, %s103
      %p107 = scmp.eq.s32.totalorder %s20, 0
      %p108 = por %p106, %p107
      %p109 = scmp.ne.s32.totalorder %s101, %s103
      %p110 = scmp.eq.s32.totalorder %s25, 1
      %p111 = por %p109, %p110
      %p112 = scmp.ne.s32.totalorder %s103, %s104
      %p113 = scmp.eq.s32.totalorder %s25, 0
      %p114 = por %p112, %p113
      %p115 = scmp.ne.s32.totalorder %s103, %s104
      %p116 = scmp.eq.s32.totalorder %s26, 1
      %p117 = por %p115, %p116
      %p119 = scmp.ne.s32.totalorder %s104, %s118
      %p120 = scmp.eq.s32.totalorder %s26, 0
      %p121 = por %p119, %p120
      %s123 = sadd.s32 %s122, 1
      %p126 = scmp.eq.s32.totalorder %s20, 1
      %p127 = scmp.ne.s32.totalorder %s122, %s124
      %p128 = scmp.eq.s32.totalorder %s20, 0
      %p129 = por %p127, %p128
      %p130 = scmp.ne.s32.totalorder %s122, %s124
      %p131 = scmp.eq.s32.totalorder %s25, 1
      %p132 = por %p130, %p131
      %p133 = scmp.ne.s32.totalorder %s124, %s125
      %p134 = scmp.eq.s32.totalorder %s25, 0
      %p135 = por %p133, %p134
      %p136 = scmp.ne.s32.totalorder %s124, %s125
      %p137 = scmp.eq.s32.totalorder %s26, 1
      %p138 = por %p136, %p137
      %p140 = scmp.ne.s32.totalorder %s125, %s139
      %p141 = scmp.eq.s32.totalorder %s26, 0
      %p142 = por %p140, %p141
      %s143 = ssub.s32 %s20, %s27
      %p144 = scmp.eq.s32.totalorder %s143, 0
      %s146 = sadd.s32 %s145, 1
      %s147 = scalar_select %p144, %s145, %s146
      %p150 = pneg %p144
      %p151 = scmp.eq.s32.totalorder %s20, 1
      %p152 = por %p150, %p151
      %p153 = scmp.ne.s32.totalorder %s145, %s148
      %p154 = scmp.eq.s32.totalorder %s20, 0
      %p155 = por %p153, %p154
      %p156 = scmp.ne.s32.totalorder %s145, %s148
      %p157 = scmp.eq.s32.totalorder %s25, 1
      %p158 = por %p156, %p157
      %p159 = scmp.ne.s32.totalorder %s148, %s149
      %p160 = scmp.eq.s32.totalorder %s25, 0
      %p161 = por %p159, %p160
      %p162 = scmp.ne.s32.totalorder %s148, %s149
      %p163 = scmp.eq.s32.totalorder %s26, 1
      %p164 = por %p162, %p163
      %p166 = scmp.ne.s32.totalorder %s149, %s165
      %p167 = scmp.eq.s32.totalorder %s26, 0
      %p168 = por %p166, %p167
      %s169 = ssub.s32 %s20, %s27
      %p170 = scmp.eq.s32.totalorder %s169, 0
      %s172 = sadd.s32 %s171, 1
      %s173 = scalar_select %p170, %s171, %s172
      %p176 = pneg %p170
      %p177 = scmp.eq.s32.totalorder %s20, 1
      %p178 = por %p176, %p177
      %p179 = scmp.ne.s32.totalorder %s171, %s174
      %p180 = scmp.eq.s32.totalorder %s20, 0
      %p181 = por %p179, %p180
      %p182 = scmp.ne.s32.totalorder %s171, %s174
      %p183 = scmp.eq.s32.totalorder %s25, 1
      %p184 = por %p182, %p183
      %p185 = scmp.ne.s32.totalorder %s174, %s175
      %p186 = scmp.eq.s32.totalorder %s25, 0
      %p187 = por %p185, %p186
      %p188 = scmp.ne.s32.totalorder %s174, %s175
      %p189 = scmp.eq.s32.totalorder %s26, 1
      %p190 = por %p188, %p189
      %p192 = scmp.ne.s32.totalorder %s175, %s191
      %p193 = scmp.eq.s32.totalorder %s26, 0
      %p194 = por %p192, %p193
      %p195 = scmp.le.s32.totalorder 1, %s20
      %p196 = scmp.lt.s32.totalorder %s20, 3
      %p197 = pnand %p195, %p196
      %p198 = pneg %p197
      // Predicated region
      $region9: #{tpu_custom_call.1} parent=5 // pred_check
        _
      $region10: #{tpu_custom_call.1} parent=5 // pred_check_branch
        %200 = sbr.rel (%p197) target = $region12
      $region11: #{tpu_custom_call.1} parent=5 // pred_region
        %s201 = ssub.s32 %s20, 1
        // Predicated region
        $region13: #{tpu_custom_call.1} parent=11 // pred_check
          %p202 = pneg %p41
        $region14: #{tpu_custom_call.1} parent=11 // pred_check_branch
          %204 = sbr.rel (%p202) target = $region16
        $region15: #{tpu_custom_call.1} parent=11 // pred_region
          _
        $region16: #{tpu_custom_call.1} parent=11 // pred_fallthru
          _
        // Predicated region
        $region17: #{tpu_custom_call.1} parent=11 // pred_check
          %p205 = pneg %p114
        $region18: #{tpu_custom_call.1} parent=11 // pred_check_branch
          %207 = sbr.rel (%p205) target = $region20
        $region19: #{tpu_custom_call.1} parent=11 // pred_region
          _
        $region20: #{tpu_custom_call.1} parent=11 // pred_fallthru
          _
        // Predicated region
        $region21: #{tpu_custom_call.1} parent=11 // pred_check
          %p208 = pneg %p135
        $region22: #{tpu_custom_call.1} parent=11 // pred_check_branch
          %210 = sbr.rel (%p208) target = $region24
        $region23: #{tpu_custom_call.1} parent=11 // pred_region
          _
        $region24: #{tpu_custom_call.1} parent=11 // pred_fallthru
          _
      $region12: #{tpu_custom_call.1} parent=5 // pred_fallthru
        _
      %p211 = scmp.lt.s32.totalorder %s20, 2
      // Predicated region
      $region25: #{tpu_custom_call.1} parent=5 // pred_check
        %p212 = pneg %p211
      $region26: #{tpu_custom_call.1} parent=5 // pred_check_branch
        %214 = sbr.rel (%p212) target = $region28
      $region27: #{tpu_custom_call.1} parent=5 // pred_region
        // Predicated region
        $region29: #{tpu_custom_call.1} parent=27 // pred_check
          %p215 = pneg %p61
        $region30: #{tpu_custom_call.1} parent=27 // pred_check_branch
          %217 = sbr.rel (%p215) target = $region32
        $region31: #{tpu_custom_call.1} parent=27 // pred_region
          %p218 = scmp.lt.s32.totalorder %s20, 1
          %s219 = scalar_select %p218, %s20, 1
          %s220 = smul.addr %s219, 2
          %s221 = smul.addr %s220, 4
          %s222 = scalar_lea.vmem %s1, %s221
        $region32: #{tpu_custom_call.1} parent=27 // pred_fallthru
          _
        // Predicated region
        $region33: #{tpu_custom_call.1} parent=27 // pred_check
          %p223 = pneg %p87
        $region34: #{tpu_custom_call.1} parent=27 // pred_check_branch
          %225 = sbr.rel (%p223) target = $region36
        $region35: #{tpu_custom_call.1} parent=27 // pred_region
          %p226 = scmp.lt.s32.totalorder %s20, 1
          %s227 = scalar_select %p226, %s20, 1
          %s228 = smul.addr %s227, 2
          %s229 = scalar_lea.vmem %s2, %s228
        $region36: #{tpu_custom_call.1} parent=27 // pred_fallthru
          _
      $region28: #{tpu_custom_call.1} parent=5 // pred_fallthru
        _
      %p230 = scmp.le.s32.totalorder 1, %s20
      %p231 = scmp.lt.s32.totalorder %s20, 3
      %p232 = pnand %p230, %p231
      %p233 = pneg %p232
      // Predicated region
      $region37: #{tpu_custom_call.1} parent=5 // pred_check
        _
      $region38: #{tpu_custom_call.1} parent=5 // pred_check_branch
        %235 = sbr.rel (%p232) target = $region40
      $region39: #{tpu_custom_call.1} parent=5 // pred_region
        %s236 = ssub.s32 %s20, 1
        %p237 = pneg %p41
        %p238 = pneg %p38
        %p239 = scmp.lt.s32.totalorder %s25, 1
        %s240 = scalar_select %p239, %s25, 1
        %s241 = smul.addr %s240, 2
        %s242 = smul.addr %s241, 4
        %s243 = scalar_lea.vmem %s1, %s242
        %p244 = pneg %p67
        %p245 = pneg %p64
        %p246 = scmp.lt.s32.totalorder %s25, 1
        %s247 = scalar_select %p246, %s25, 1
        %s248 = smul.addr %s247, 2
        %s249 = scalar_lea.vmem %s2, %s248
        %p250 = pneg %p93
        %p251 = pneg %p90
        %p252 = pneg %p114
        %p253 = pneg %p111
        %p254 = pneg %p135
        %p255 = pneg %p132
        %p256 = pneg %p161
        %p257 = pneg %p158
        %s258 = sand.u32 %s148, 1
        %s259 = scalar_lea.sflag [#allocation4], %s258
        %s260 = sand.u32 %s148, 1
        %s261 = smul.addr %s260, 2
        %s262 = scalar_lea.vmem [#allocation3], %s261
        %p263 = pneg %p187
        %p264 = pneg %p184
        %s265 = sand.u32 %s174, 1
        %s266 = scalar_lea.sflag [#allocation6], %s265
        %s267 = sand.u32 %s174, 1
        %s268 = smul.addr %s267, 2
        %s269 = scalar_lea.vmem [#allocation5], %s268
        %p270 = scmp.lt.s32.totalorder %s25, 1
        %s271 = scalar_select %p270, %s25, 1
        %s272 = smul.addr %s271, 2
        %s273 = smul.addr %s272, 4
        %s274 = scalar_lea.vmem %s1, %s273
        %p275 = scmp.lt.s32.totalorder %s25, 1
        %s276 = scalar_select %p275, %s25, 1
        %s277 = smul.addr %s276, 2
        %s278 = scalar_lea.vmem %s2, %s277
        %v279 = vld [vmem:[%s274] sm:$0xff]
        %v280 = vld [vmem:[%s3] sm:$0xff]
        %v281 = vld [vmem:[%s3 + $0x8] sm:$0xff]
        %v282 = vld [vmem:[%s3 + $0x10] sm:$0xff]
        %v283 = vld [vmem:[%s3 + $0x18] sm:$0xff]
        %v285 = vcombine.high %v279, %v279
        %vm286 = vcmask 31744
        %v288 = vsel %vm286, %v280, 0
        %v291 = vsel %vm286, %v281, 0
        %v294 = vsel %vm286, %v282, 0
        %v297 = vsel %vm286, %v283, 0
        %vm299 = vcmask 1043456
        %v300 = vsel %vm299, %v279, 0
        %v302 = vsel %vm299, %v285, 0
        %304 = vmatprep.subr.mxu0 %v302
        %305 = vmatpush1.msra.mxu0 %v300
        %306 = vmatprep.subr.mxu0 0.0
        %307 = vmatpush1.msra.mxu0 0.0
        %308 = vmatprep.subr.mxu0 0.0
        %309 = vmatpush1.msra.mxu0 0.0
        %310 = vmatprep.subr.mxu0 0.0
        %311 = vmatpush1.msra.mxu0 0.0
        %312 = vmatprep.subr.mxu0 0.0
        %313 = vmatpush1.msra.mxu0 0.0
        %314 = vmatprep.subr.mxu0 0.0
        %315 = vmatpush1.msra.mxu0 0.0
        %316 = vmatprep.subr.mxu0 0.0
        %317 = vmatpush1.msra.mxu0 0.0
        %318 = vmatprep.subr.mxu0 0.0
        %319 = vmatpush1.msra.mxu0 0.0
        %320 = vmatprep.subr.mxu0 0.0
        %321 = vmatpush1.msra.mxu0 0.0
        %322 = vmatprep.subr.mxu0 0.0
        %323 = vmatpush1.msra.mxu0 0.0
        %324 = vmatprep.subr.mxu0 0.0
        %325 = vmatpush1.msra.mxu0 0.0
        %326 = vmatprep.subr.mxu0 0.0
        %327 = vmatpush1.msra.mxu0 0.0
        %328 = vmatprep.subr.mxu0 0.0
        %329 = vmatpush1.msra.mxu0 0.0
        %330 = vmatprep.subr.mxu0 0.0
        %331 = vmatpush1.msra.mxu0 0.0
        %332 = vmatprep.subr.mxu0 0.0
        %333 = vmatpush1.msra.mxu0 0.0
        %334 = vmatprep.subr.mxu0 0.0
        %335 = vmatpush1.msra.mxu0 0.0
        %336 = vmatprep.subr.mxu0 0.0
        %337 = vmatpush1.msra.mxu0 0.0
        %338 = vmatprep.subr.mxu0 0.0
        %339 = vmatpush1.msra.mxu0 0.0
        %340 = vmatprep.subr.mxu0 0.0
        %341 = vmatpush1.msra.mxu0 0.0
        %342 = vmatprep.subr.mxu0 0.0
        %343 = vmatpush1.msra.mxu0 0.0
        %344 = vmatprep.subr.mxu0 0.0
        %345 = vmatpush1.msra.mxu0 0.0
        %346 = vmatprep.subr.mxu0 0.0
        %347 = vmatpush1.msra.mxu0 0.0
        %348 = vmatprep.subr.mxu0 0.0
        %349 = vmatpush1.msra.mxu0 0.0
        %350 = vmatprep.subr.mxu0 0.0
        %351 = vmatpush1.msra.mxu0 0.0
        %352 = vmatprep.subr.mxu0 0.0
        %353 = vmatpush1.msra.mxu0 0.0
        %354 = vmatprep.subr.mxu0 0.0
        %355 = vmatpush1.msra.mxu0 0.0
        %356 = vmatprep.subr.mxu0 0.0
        %357 = vmatpush1.msra.mxu0 0.0
        %358 = vmatprep.subr.mxu0 0.0
        %359 = vmatpush1.msra.mxu0 0.0
        %360 = vmatprep.subr.mxu0 0.0
        %361 = vmatpush1.msra.mxu0 0.0
        %362 = vmatprep.subr.mxu0 0.0
        %363 = vmatpush1.msra.mxu0 0.0
        %364 = vmatprep.subr.mxu0 0.0
        %365 = vmatpush1.msra.mxu0 0.0
        %366 = vmatprep.subr.mxu0 0.0
        %367 = vmatpush1.msra.mxu0 0.0
        %368 = vmatprep.mubr.f32.mxu0 0.0
        %369 = vmatmul.mubr.f32.gmra.mrb[0].mxu0 %v288
        %v370 = vpop.f32.mrb[0].mxu0
        %v371 = vadd.f32 0.0, %v370
        %v372 = vpop.f32.mrb[0].mxu0
        %v373 = vadd.f32 0.0, %v372
        %374 = vmatprep.mubr.f32.mxu0 0.0
        %375 = vmatmul.mubr.f32.gmra.mrb[0].mxu0 %v291
        %v376 = vpop.f32.mrb[0].mxu0
        %v377 = vadd.f32 0.0, %v376
        %v378 = vpop.f32.mrb[0].mxu0
        %v379 = vadd.f32 0.0, %v378
        %380 = vmatprep.mubr.f32.mxu0 0.0
        %381 = vmatmul.mubr.f32.gmra.mrb[0].mxu0 %v294
        %v382 = vpop.f32.mrb[0].mxu0
        %v383 = vadd.f32 0.0, %v382
        %v384 = vpop.f32.mrb[0].mxu0
        %v385 = vadd.f32 0.0, %v384
        %386 = vmatprep.mubr.f32.mxu0 0.0
        %387 = vmatmul.mubr.f32.gmra.mrb[0].mxu0 %v297
        %v388 = vpop.f32.mrb[0].mxu0
        %v389 = vadd.f32 0.0, %v388
        %v390 = vpop.f32.mrb[0].mxu0
        %v391 = vadd.f32 0.0, %v390
        %392 = vdwg.mxu0
        %v393 = vmax.f32 %v371, 0.0
        %v394 = vmax.f32 %v373, 0.0
        %v395 = vmax.f32 %v377, 0.0
        %v396 = vmax.f32 %v379, 0.0
        %v397 = vmax.f32 %v383, 0.0
        %v398 = vmax.f32 %v385, 0.0
        %v399 = vmax.f32 %v389, 0.0
        %v400 = vmax.f32 %v391, 0.0
        %v401 = vld [vmem:[%s4] sm:$0x1]
        %vm402 = vcmask 261120
        %v404 = vsel %vm402, %v401, 0
        %406 = vmatprep.subr.mxu0 %v394
        %407 = vmatpush1.msra.mxu0 %v393
        %408 = vmatprep.subr.mxu0 %v396
        %409 = vmatpush1.msra.mxu0 %v395
        %410 = vmatprep.subr.mxu0 %v398
        %411 = vmatpush1.msra.mxu0 %v397
        %412 = vmatprep.subr.mxu0 %v400
        %413 = vmatpush1.msra.mxu0 %v399
        %414 = vmatprep.subr.mxu0 0.0
        %415 = vmatpush1.msra.mxu0 0.0
        %416 = vmatprep.subr.mxu0 0.0
        %417 = vmatpush1.msra.mxu0 0.0
        %418 = vmatprep.subr.mxu0 0.0
        %419 = vmatpush1.msra.mxu0 0.0
        %420 = vmatprep.subr.mxu0 0.0
        %421 = vmatpush1.msra.mxu0 0.0
        %422 = vmatprep.subr.mxu0 0.0
        %423 = vmatpush1.msra.mxu0 0.0
        %424 = vmatprep.subr.mxu0 0.0
        %425 = vmatpush1.msra.mxu0 0.0
        %426 = vmatprep.subr.mxu0 0.0
        %427 = vmatpush1.msra.mxu0 0.0
        %428 = vmatprep.subr.mxu0 0.0
        %429 = vmatpush1.msra.mxu0 0.0
        %430 = vmatprep.subr.mxu0 0.0
        %431 = vmatpush1.msra.mxu0 0.0
        %432 = vmatprep.subr.mxu0 0.0
        %433 = vmatpush1.msra.mxu0 0.0
        %434 = vmatprep.subr.mxu0 0.0
        %435 = vmatpush1.msra.mxu0 0.0
        %436 = vmatprep.subr.mxu0 0.0
        %437 = vmatpush1.msra.mxu0 0.0
        %438 = vmatprep.subr.mxu0 0.0
        %439 = vmatpush1.msra.mxu0 0.0
        %440 = vmatprep.subr.mxu0 0.0
        %441 = vmatpush1.msra.mxu0 0.0
        %442 = vmatprep.subr.mxu0 0.0
        %443 = vmatpush1.msra.mxu0 0.0
        %444 = vmatprep.subr.mxu0 0.0
        %445 = vmatpush1.msra.mxu0 0.0
        %446 = vmatprep.subr.mxu0 0.0
        %447 = vmatpush1.msra.mxu0 0.0
        %448 = vmatprep.subr.mxu0 0.0
        %449 = vmatpush1.msra.mxu0 0.0
        %450 = vmatprep.subr.mxu0 0.0
        %451 = vmatpush1.msra.mxu0 0.0
        %452 = vmatprep.subr.mxu0 0.0
        %453 = vmatpush1.msra.mxu0 0.0
        %454 = vmatprep.subr.mxu0 0.0
        %455 = vmatpush1.msra.mxu0 0.0
        %456 = vmatprep.subr.mxu0 0.0
        %457 = vmatpush1.msra.mxu0 0.0
        %458 = vmatprep.subr.mxu0 0.0
        %459 = vmatpush1.msra.mxu0 0.0
        %460 = vmatprep.subr.mxu0 0.0
        %461 = vmatpush1.msra.mxu0 0.0
        %462 = vmatprep.subr.mxu0 0.0
        %463 = vmatpush1.msra.mxu0 0.0
        %464 = vmatprep.subr.mxu0 0.0
        %465 = vmatpush1.msra.mxu0 0.0
        %466 = vmatprep.subr.mxu0 0.0
        %467 = vmatpush1.msra.mxu0 0.0
        %468 = vmatprep.subr.mxu0 0.0
        %469 = vmatpush1.msra.mxu0 0.0
        %470 = vmatprep.mubr.f32.mxu0 0.0
        %471 = vmatmul.mubr.f32.gmra.mrb[0].mxu0 %v404
        %v472 = vpop.f32.mrb[0].mxu0
        %v473 = vadd.f32 0.0, %v472
        %v474 = vpop.f32.mrb[0].mxu0
        %v475 = vadd.f32 0.0, %v474
        %476 = vdwg.mxu0
        %s477 = sld [smem:[#allocation2]]
        %v478 = vstv %s477
        %v479 = vrcp.pop %v478
        %s480 = vtos %v479
        %v481 = vld [vmem:[%s278] sm:$0x3]
        %v483 = vlaneseq
        %v484 = vshrl.u32 %v483, 7
        %v485 = vsub.s32 0, %v484
        %v486 = vrot.slane %v481, %v485
        %v487 = vlaneseq
        %v488 = vshrl.u32 %v487, 7
        %v489 = vsub.s32 1, %v488
        %v490 = vrot.slane %v481, %v489
        %v493 = vadd.f32 %v473, %v486
        %v494 = vadd.f32 %v475, %v490
        %v495 = vstv %s480
        %v496 = vmul.f32 %v493, %v495
        %v497 = vmul.f32 %v494, %v495
        %vm498 = vcmask 1040384
        %v499 = vsel %vm498, %v496, -inf
        %v500 = vsel %vm498, %v497, -inf
        %v501 = vmax.f32 %v499, %v500
        %502 = vmax.xlane.f32.xlu0 %v501
        %v503 = vpop.xlane.xlu0 %502
        %v504 = vsub.f32 %v496, %v503
        %v505 = vsub.f32 %v497, %v503
        %v506 = vmul.f32 %v504, 1.442695
        %v507 = vpow.pop %v506
        %v508 = vmul.f32 %v505, 1.442695
        %v509 = vpow.pop %v508
        %v510 = vsel %vm498, %v507, 0.0
        %v511 = vsel %vm498, %v509, 0.0
        %v512 = vadd.f32 %v510, %v511
        %513 = vadd.xlane.f32.xlu0 %v512
        %v514 = vpop.xlane.xlu0 %513
        %v515 = vrcp.pop %v514
        %v516 = vmul.f32 %v507, %v515
        %v517 = vmul.f32 %v509, %v515
        %v518 = vlaneseq
        %v519 = vshrl.u32 %v518, 7
        %v520 = vsub.s32 0, %v519
        %v521 = vrot.slane %v516, %v520
        %v522 = vlaneseq
        %v523 = vshrl.u32 %v522, 7
        %v524 = vsub.s32 0, %v523
        %v525 = vrot.slane %v517, %v524
        %526 = vxpose.xlu0.b32.start [1/16] %v521, 128
        %527 = vxpose.xlu0.b32.cont [2/16] %v521, 128
        %528 = vxpose.xlu0.b32.cont [3/16] %v521, 128
        %529 = vxpose.xlu0.b32.cont [4/16] %v521, 128
        %530 = vxpose.xlu0.b32.cont [5/16] %v521, 128
        %531 = vxpose.xlu0.b32.cont [6/16] %v521, 128
        %532 = vxpose.xlu0.b32.cont [7/16] %v521, 128
        %533 = vxpose.xlu0.b32.cont [8/16] %v521, 128
        %534 = vxpose.xlu0.b32.cont [9/16] %v521, 128
        %535 = vxpose.xlu0.b32.cont [10/16] %v521, 128
        %536 = vxpose.xlu0.b32.cont [11/16] %v521, 128
        %537 = vxpose.xlu0.b32.cont [12/16] %v521, 128
        %538 = vxpose.xlu0.b32.cont [13/16] %v521, 128
        %539 = vxpose.xlu0.b32.cont [14/16] %v521, 128
        %540 = vxpose.xlu0.b32.cont [15/16] %v521, 128
        %541 = vxpose.xlu0.b32.end [16/16] %v521, 128
        %v542 = vpop.trf.xlu0
        %v543 = vpop.trf.xlu0
        %v544 = vpop.trf.xlu0
        %v545 = vpop.trf.xlu0
        %v546 = vpop.trf.xlu0
        %v547 = vpop.trf.xlu0
        %v548 = vpop.trf.xlu0
        %v549 = vpop.trf.xlu0
        %v550 = vpop.trf.xlu0
        %v551 = vpop.trf.xlu0
        %v552 = vpop.trf.xlu0
        %v553 = vpop.trf.xlu0
        %v554 = vpop.trf.xlu0
        %v555 = vpop.trf.xlu0
        %v556 = vpop.trf.xlu0
        %v557 = vpop.trf.xlu0
        %558 = vxpose.xlu0.b32.start [1/16] %v525, 128
        %559 = vxpose.xlu0.b32.cont [2/16] %v525, 128
        %560 = vxpose.xlu0.b32.cont [3/16] %v525, 128
        %561 = vxpose.xlu0.b32.cont [4/16] %v525, 128
        %562 = vxpose.xlu0.b32.cont [5/16] %v525, 128
        %563 = vxpose.xlu0.b32.cont [6/16] %v525, 128
        %564 = vxpose.xlu0.b32.cont [7/16] %v525, 128
        %565 = vxpose.xlu0.b32.cont [8/16] %v525, 128
        %566 = vxpose.xlu0.b32.cont [9/16] %v525, 128
        %567 = vxpose.xlu0.b32.cont [10/16] %v525, 128
        %568 = vxpose.xlu0.b32.cont [11/16] %v525, 128
        %569 = vxpose.xlu0.b32.cont [12/16] %v525, 128
        %570 = vxpose.xlu0.b32.cont [13/16] %v525, 128
        %571 = vxpose.xlu0.b32.cont [14/16] %v525, 128
        %572 = vxpose.xlu0.b32.cont [15/16] %v525, 128
        %573 = vxpose.xlu0.b32.end [16/16] %v525, 128
        %v574 = vpop.trf.xlu0
        %v575 = vpop.trf.xlu0
        %v576 = vpop.trf.xlu0
        %v577 = vpop.trf.xlu0
        %v578 = vpop.trf.xlu0
        %v579 = vpop.trf.xlu0
        %v580 = vpop.trf.xlu0
        %v581 = vpop.trf.xlu0
        %v582 = vpop.trf.xlu0
        %v583 = vpop.trf.xlu0
        %v584 = vpop.trf.xlu0
        %v585 = vpop.trf.xlu0
        %v586 = vpop.trf.xlu0
        %v587 = vpop.trf.xlu0
        %v588 = vpop.trf.xlu0
        %v589 = vpop.trf.xlu0
        %vm590 = vcmp.gt.f32.partialorder %v542, %v521
        %vm591 = vcmp.gt.f32.partialorder %v542, %v525
        %vm592 = vcmp.gt.f32.partialorder %v543, %v521
        %vm593 = vcmp.gt.f32.partialorder %v543, %v525
        %vm594 = vcmp.gt.f32.partialorder %v544, %v521
        %vm595 = vcmp.gt.f32.partialorder %v544, %v525
        %vm596 = vcmp.gt.f32.partialorder %v545, %v521
        %vm597 = vcmp.gt.f32.partialorder %v545, %v525
        %vm598 = vcmp.gt.f32.partialorder %v546, %v521
        %vm599 = vcmp.gt.f32.partialorder %v546, %v525
        %vm600 = vcmp.gt.f32.partialorder %v547, %v521
        %vm601 = vcmp.gt.f32.partialorder %v547, %v525
        %vm602 = vcmp.gt.f32.partialorder %v548, %v521
        %vm603 = vcmp.gt.f32.partialorder %v548, %v525
        %vm604 = vcmp.gt.f32.partialorder %v549, %v521
        %vm605 = vcmp.gt.f32.partialorder %v549, %v525
        %vm606 = vcmp.gt.f32.partialorder %v550, %v521
        %vm607 = vcmp.gt.f32.partialorder %v550, %v525
        %vm608 = vcmp.gt.f32.partialorder %v551, %v521
        %vm609 = vcmp.gt.f32.partialorder %v551, %v525
        %vm610 = vcmp.gt.f32.partialorder %v552, %v521
        %vm611 = vcmp.gt.f32.partialorder %v552, %v525
        %vm612 = vcmp.gt.f32.partialorder %v553, %v521
        %vm613 = vcmp.gt.f32.partialorder %v553, %v525
        %vm614 = vcmp.gt.f32.partialorder %v554, %v521
        %vm615 = vcmp.gt.f32.partialorder %v554, %v525
        %vm616 = vcmp.gt.f32.partialorder %v555, %v521
        %vm617 = vcmp.gt.f32.partialorder %v555, %v525
        %vm618 = vcmp.gt.f32.partialorder %v556, %v521
        %vm619 = vcmp.gt.f32.partialorder %v556, %v525
        %vm620 = vcmp.gt.f32.partialorder %v557, %v521
        %vm621 = vcmp.gt.f32.partialorder %v557, %v525
        %vm622 = vcmp.gt.f32.partialorder %v574, %v521
        %vm623 = vcmp.gt.f32.partialorder %v574, %v525
        %vm624 = vcmp.gt.f32.partialorder %v575, %v521
        %vm625 = vcmp.gt.f32.partialorder %v575, %v525
        %vm626 = vcmp.gt.f32.partialorder %v576, %v521
        %vm627 = vcmp.gt.f32.partialorder %v576, %v525
        %vm628 = vcmp.gt.f32.partialorder %v577, %v521
        %vm629 = vcmp.gt.f32.partialorder %v577, %v525
        %vm630 = vcmp.gt.f32.partialorder %v578, %v521
        %vm631 = vcmp.gt.f32.partialorder %v578, %v525
        %vm632 = vcmp.gt.f32.partialorder %v579, %v521
        %vm633 = vcmp.gt.f32.partialorder %v579, %v525
        %vm634 = vcmp.gt.f32.partialorder %v580, %v521
        %vm635 = vcmp.gt.f32.partialorder %v580, %v525
        %vm636 = vcmp.gt.f32.partialorder %v581, %v521
        %vm637 = vcmp.gt.f32.partialorder %v581, %v525
        %vm638 = vcmp.gt.f32.partialorder %v582, %v521
        %vm639 = vcmp.gt.f32.partialorder %v582, %v525
        %vm640 = vcmp.gt.f32.partialorder %v583, %v521
        %vm641 = vcmp.gt.f32.partialorder %v583, %v525
        %vm642 = vcmp.gt.f32.partialorder %v584, %v521
        %vm643 = vcmp.gt.f32.partialorder %v584, %v525
        %vm644 = vcmp.gt.f32.partialorder %v585, %v521
        %vm645 = vcmp.gt.f32.partialorder %v585, %v525
        %vm646 = vcmp.gt.f32.partialorder %v586, %v521
        %vm647 = vcmp.gt.f32.partialorder %v586, %v525
        %vm648 = vcmp.gt.f32.partialorder %v587, %v521
        %vm649 = vcmp.gt.f32.partialorder %v587, %v525
        %vm650 = vcmp.gt.f32.partialorder %v588, %v521
        %vm651 = vcmp.gt.f32.partialorder %v588, %v525
        %vm652 = vcmp.gt.f32.partialorder %v589, %v521
        %vm653 = vcmp.gt.f32.partialorder %v589, %v525
        %v654 = vsel %vm590, 1, 0
        %v655 = vsel %vm591, 1, 0
        %v656 = vsel %vm592, 1, 0
        %v657 = vsel %vm593, 1, 0
        %v658 = vsel %vm594, 1, 0
        %v659 = vsel %vm595, 1, 0
        %v660 = vsel %vm596, 1, 0
        %v661 = vsel %vm597, 1, 0
        %v662 = vsel %vm598, 1, 0
        %v663 = vsel %vm599, 1, 0
        %v664 = vsel %vm600, 1, 0
        %v665 = vsel %vm601, 1, 0
        %v666 = vsel %vm602, 1, 0
        %v667 = vsel %vm603, 1, 0
        %v668 = vsel %vm604, 1, 0
        %v669 = vsel %vm605, 1, 0
        %v670 = vsel %vm606, 1, 0
        %v671 = vsel %vm607, 1, 0
        %v672 = vsel %vm608, 1, 0
        %v673 = vsel %vm609, 1, 0
        %v674 = vsel %vm610, 1, 0
        %v675 = vsel %vm611, 1, 0
        %v676 = vsel %vm612, 1, 0
        %v677 = vsel %vm613, 1, 0
        %v678 = vsel %vm614, 1, 0
        %v679 = vsel %vm615, 1, 0
        %v680 = vsel %vm616, 1, 0
        %v681 = vsel %vm617, 1, 0
        %v682 = vsel %vm618, 1, 0
        %v683 = vsel %vm619, 1, 0
        %v684 = vsel %vm620, 1, 0
        %v685 = vsel %vm621, 1, 0
        %v686 = vsel %vm622, 1, 0
        %v687 = vsel %vm623, 1, 0
        %v688 = vsel %vm624, 1, 0
        %v689 = vsel %vm625, 1, 0
        %v690 = vsel %vm626, 1, 0
        %v691 = vsel %vm627, 1, 0
        %v692 = vsel %vm628, 1, 0
        %v693 = vsel %vm629, 1, 0
        %v694 = vsel %vm630, 1, 0
        %v695 = vsel %vm631, 1, 0
        %v696 = vsel %vm632, 1, 0
        %v697 = vsel %vm633, 1, 0
        %v698 = vsel %vm634, 1, 0
        %v699 = vsel %vm635, 1, 0
        %v700 = vsel %vm636, 1, 0
        %v701 = vsel %vm637, 1, 0
        %v702 = vsel %vm638, 1, 0
        %v703 = vsel %vm639, 1, 0
        %v704 = vsel %vm640, 1, 0
        %v705 = vsel %vm641, 1, 0
        %v706 = vsel %vm642, 1, 0
        %v707 = vsel %vm643, 1, 0
        %v708 = vsel %vm644, 1, 0
        %v709 = vsel %vm645, 1, 0
        %v710 = vsel %vm646, 1, 0
        %v711 = vsel %vm647, 1, 0
        %v712 = vsel %vm648, 1, 0
        %v713 = vsel %vm649, 1, 0
        %v714 = vsel %vm650, 1, 0
        %v715 = vsel %vm651, 1, 0
        %v716 = vsel %vm652, 1, 0
        %v717 = vsel %vm653, 1, 0
        %v718 = vcvt.s32.f32 %v654
        %v719 = vcvt.s32.f32 %v655
        %v720 = vcvt.s32.f32 %v656
        %v721 = vcvt.s32.f32 %v657
        %v722 = vcvt.s32.f32 %v658
        %v723 = vcvt.s32.f32 %v659
        %v724 = vcvt.s32.f32 %v660
        %v725 = vcvt.s32.f32 %v661
        %v726 = vcvt.s32.f32 %v662
        %v727 = vcvt.s32.f32 %v663
        %v728 = vcvt.s32.f32 %v664
        %v729 = vcvt.s32.f32 %v665
        %v730 = vcvt.s32.f32 %v666
        %v731 = vcvt.s32.f32 %v667
        %v732 = vcvt.s32.f32 %v668
        %v733 = vcvt.s32.f32 %v669
        %v734 = vcvt.s32.f32 %v670
        %v735 = vcvt.s32.f32 %v671
        %v736 = vcvt.s32.f32 %v672
        %v737 = vcvt.s32.f32 %v673
        %v738 = vcvt.s32.f32 %v674
        %v739 = vcvt.s32.f32 %v675
        %v740 = vcvt.s32.f32 %v676
        %v741 = vcvt.s32.f32 %v677
        %v742 = vcvt.s32.f32 %v678
        %v743 = vcvt.s32.f32 %v679
        %v744 = vcvt.s32.f32 %v680
        %v745 = vcvt.s32.f32 %v681
        %v746 = vcvt.s32.f32 %v682
        %v747 = vcvt.s32.f32 %v683
        %v748 = vcvt.s32.f32 %v684
        %v749 = vcvt.s32.f32 %v685
        %v750 = vcvt.s32.f32 %v686
        %v751 = vcvt.s32.f32 %v687
        %v752 = vcvt.s32.f32 %v688
        %v753 = vcvt.s32.f32 %v689
        %v754 = vcvt.s32.f32 %v690
        %v755 = vcvt.s32.f32 %v691
        %v756 = vcvt.s32.f32 %v692
        %v757 = vcvt.s32.f32 %v693
        %v758 = vcvt.s32.f32 %v694
        %v759 = vcvt.s32.f32 %v695
        %v760 = vcvt.s32.f32 %v696
        %v761 = vcvt.s32.f32 %v697
        %v762 = vcvt.s32.f32 %v698
        %v763 = vcvt.s32.f32 %v699
        %v764 = vcvt.s32.f32 %v700
        %v765 = vcvt.s32.f32 %v701
        %v766 = vcvt.s32.f32 %v702
        %v767 = vcvt.s32.f32 %v703
        %v768 = vcvt.s32.f32 %v704
        %v769 = vcvt.s32.f32 %v705
        %v770 = vcvt.s32.f32 %v706
        %v771 = vcvt.s32.f32 %v707
        %v772 = vcvt.s32.f32 %v708
        %v773 = vcvt.s32.f32 %v709
        %v774 = vcvt.s32.f32 %v710
        %v775 = vcvt.s32.f32 %v711
        %v776 = vcvt.s32.f32 %v712
        %v777 = vcvt.s32.f32 %v713
        %v778 = vcvt.s32.f32 %v714
        %v779 = vcvt.s32.f32 %v715
        %v780 = vcvt.s32.f32 %v716
        %v781 = vcvt.s32.f32 %v717
        %v782 = vadd.f32 %v718, %v720
        %v783 = vadd.f32 %v782, %v722
        %v784 = vadd.f32 %v783, %v724
        %v785 = vadd.f32 %v784, %v726
        %v786 = vadd.f32 %v785, %v728
        %v787 = vadd.f32 %v786, %v730
        %v788 = vadd.f32 %v787, %v732
        %v789 = vadd.f32 %v788, %v734
        %v790 = vadd.f32 %v789, %v736
        %v791 = vadd.f32 %v790, %v738
        %v792 = vadd.f32 %v791, %v740
        %v793 = vadd.f32 %v792, %v742
        %v794 = vadd.f32 %v793, %v744
        %v795 = vadd.f32 %v794, %v746
        %v796 = vadd.f32 %v795, %v748
        %v797 = vadd.f32 %v796, %v750
        %v798 = vadd.f32 %v797, %v752
        %v799 = vadd.f32 %v798, %v754
        %v800 = vadd.f32 %v799, %v756
        %v801 = vadd.f32 %v800, %v758
        %v802 = vadd.f32 %v801, %v760
        %v803 = vadd.f32 %v802, %v762
        %v804 = vadd.f32 %v803, %v764
        %v805 = vadd.f32 %v804, %v766
        %v806 = vadd.f32 %v805, %v768
        %v807 = vadd.f32 %v806, %v770
        %v808 = vadd.f32 %v807, %v772
        %v809 = vadd.f32 %v808, %v774
        %v810 = vadd.f32 %v809, %v776
        %v811 = vadd.f32 %v810, %v778
        %v812 = vadd.f32 %v811, %v780
        %v813 = vrot.slane %v812, 4
        %v814 = vadd.f32 %v812, %v813
        %v815 = vrot.slane %v814, 2
        %v816 = vadd.f32 %v814, %v815
        %v817 = vrot.slane %v816, 1
        %v818 = vadd.f32 %v816, %v817
        %v819 = vadd.f32 %v719, %v721
        %v820 = vadd.f32 %v819, %v723
        %v821 = vadd.f32 %v820, %v725
        %v822 = vadd.f32 %v821, %v727
        %v823 = vadd.f32 %v822, %v729
        %v824 = vadd.f32 %v823, %v731
        %v825 = vadd.f32 %v824, %v733
        %v826 = vadd.f32 %v825, %v735
        %v827 = vadd.f32 %v826, %v737
        %v828 = vadd.f32 %v827, %v739
        %v829 = vadd.f32 %v828, %v741
        %v830 = vadd.f32 %v829, %v743
        %v831 = vadd.f32 %v830, %v745
        %v832 = vadd.f32 %v831, %v747
        %v833 = vadd.f32 %v832, %v749
        %v834 = vadd.f32 %v833, %v751
        %v835 = vadd.f32 %v834, %v753
        %v836 = vadd.f32 %v835, %v755
        %v837 = vadd.f32 %v836, %v757
        %v838 = vadd.f32 %v837, %v759
        %v839 = vadd.f32 %v838, %v761
        %v840 = vadd.f32 %v839, %v763
        %v841 = vadd.f32 %v840, %v765
        %v842 = vadd.f32 %v841, %v767
        %v843 = vadd.f32 %v842, %v769
        %v844 = vadd.f32 %v843, %v771
        %v845 = vadd.f32 %v844, %v773
        %v846 = vadd.f32 %v845, %v775
        %v847 = vadd.f32 %v846, %v777
        %v848 = vadd.f32 %v847, %v779
        %v849 = vadd.f32 %v848, %v781
        %v850 = vrot.slane %v849, 4
        %v851 = vadd.f32 %v849, %v850
        %v852 = vrot.slane %v851, 2
        %v853 = vadd.f32 %v851, %v852
        %v854 = vrot.slane %v853, 1
        %v855 = vadd.f32 %v853, %v854
        %vm856 = vcmp.lt.f32.partialorder %v818, 25.0
        %vm857 = vcmp.lt.f32.partialorder %v855, 25.0
        %v858 = vsel %vm856, 1, 0
        %v859 = vsel %vm857, 1, 0
        %v860 = vcvt.s32.f32 %v858
        %v861 = vcvt.s32.f32 %v859
        %v864 = vcombine.low %v860, %v861
        %v866 = vunpack.c.l.s4 1966171168
        %v867 = vunpack.c.0.s8 %v866
        %v868 = vlaneseq
        %v869 = vshrl.u32 %v868, 7
        %v870 = vsub.s32 %v867, %v869
        %v871 = vrot.slane %v864, %v870
        %v873 = vunpack.c.l.s4 1966171168
        %v874 = vunpack.c.0.s8 %v873
        %v875 = vlaneseq
        %v876 = vshrl.u32 %v875, 7
        %v877 = vsub.s32 %v874, %v876
        %v878 = vrot.slane %v871, %v877
        %v880 = vlaneseq
        %vm881 = vcmp.ge.s32.totalorder %v880, 0
        %vm882 = vcmp.lt.s32.totalorder %v880, 256
        %vm883 = vmand %vm881, %vm882
        %884 = vst.msk [vmem:[%s269] sm:$0x3] %vm883, %v878
        %v885 = vmul.f32 %v473, %v860
        %v886 = vmul.f32 %v475, %v861
        %v889 = vcombine.low %v885, %v886
        %v891 = vunpack.c.l.s4 1966171168
        %v892 = vunpack.c.0.s8 %v891
        %v893 = vlaneseq
        %v894 = vshrl.u32 %v893, 7
        %v895 = vsub.s32 %v892, %v894
        %v896 = vrot.slane %v889, %v895
        %v898 = vunpack.c.l.s4 1966171168
        %v899 = vunpack.c.0.s8 %v898
        %v900 = vlaneseq
        %v901 = vshrl.u32 %v900, 7
        %v902 = vsub.s32 %v899, %v901
        %v903 = vrot.slane %v896, %v902
        %905 = vst.msk [vmem:[%s262] sm:$0x3] %vm883, %v903
        %s906 = sand.u32 %s148, 1
        %s907 = scalar_lea.sflag [#allocation4], %s906
        %s908 = sand.u32 %s148, 1
        %s909 = smul.addr %s908, 2
        %s910 = scalar_lea.vmem [#allocation3], %s909
        %s911 = sand.u32 %s174, 1
        %s912 = scalar_lea.sflag [#allocation6], %s911
        %s913 = sand.u32 %s174, 1
        %s914 = smul.addr %s913, 2
        %s915 = scalar_lea.vmem [#allocation5], %s914
        // Predicated region
        $region41: #{tpu_custom_call.1} parent=39 // pred_check
          %p916 = pneg %p158
        $region42: #{tpu_custom_call.1} parent=39 // pred_check_branch
          %918 = sbr.rel (%p916) target = $region44
        $region43: #{tpu_custom_call.1} parent=39 // pred_region
          %s920 = ssub.s32 32, 32
          %921 = vsyncadd %s907, %s920
          %s922 = smul.addr %s25, 2
          %s923 = smul.addr %s922, 16
          %s924 = scalar_lea.hbm %s5, %s923
          %s926 = sshll.u32 %s910, 4
          %s927 = int_to_ptr.vmem [resolvable:$true] %s926
          %929 = dma.vmem_to_hbm [thread:$0]  %s927, 32, %s924, %s907
        $region44: #{tpu_custom_call.1} parent=39 // pred_fallthru
          _
        // Predicated region
        $region45: #{tpu_custom_call.1} parent=39 // pred_check
          %p930 = pneg %p184
        $region46: #{tpu_custom_call.1} parent=39 // pred_check_branch
          %932 = sbr.rel (%p930) target = $region48
        $region47: #{tpu_custom_call.1} parent=39 // pred_region
          %s934 = ssub.s32 32, 32
          %935 = vsyncadd %s912, %s934
          %s936 = smul.addr %s25, 2
          %s937 = smul.addr %s936, 16
          %s938 = scalar_lea.hbm %s6, %s937
          %s940 = sshll.u32 %s915, 4
          %s941 = int_to_ptr.vmem [resolvable:$true] %s940
          %943 = dma.vmem_to_hbm [thread:$0]  %s941, 32, %s938, %s912
        $region48: #{tpu_custom_call.1} parent=39 // pred_fallthru
          _
      $region40: #{tpu_custom_call.1} parent=5 // pred_fallthru
        _
      %p944 = scmp.le.s32.totalorder 2, %s20
      // Predicated region
      $region49: #{tpu_custom_call.1} parent=5 // pred_check
        %p945 = pneg %p944
      $region50: #{tpu_custom_call.1} parent=5 // pred_check_branch
        %947 = sbr.rel (%p945) target = $region52
      $region51: #{tpu_custom_call.1} parent=5 // pred_region
        %s948 = ssub.s32 %s20, 2
        // Predicated region
        $region53: #{tpu_custom_call.1} parent=51 // pred_check
          %p949 = pneg %p164
        $region54: #{tpu_custom_call.1} parent=51 // pred_check_branch
          %951 = sbr.rel (%p949) target = $region56
        $region55: #{tpu_custom_call.1} parent=51 // pred_region
          %s952 = sand.u32 %s149, 1
          %s953 = scalar_lea.sflag [#allocation4], %s952
          %s954 = sand.u32 %s149, 1
          %s955 = smul.addr %s954, 2
          %s956 = scalar_lea.vmem [#allocation3], %s955
          %957 = dma.done %s953, 32
        $region56: #{tpu_custom_call.1} parent=51 // pred_fallthru
          _
        // Predicated region
        $region57: #{tpu_custom_call.1} parent=51 // pred_check
          %p958 = pneg %p190
        $region58: #{tpu_custom_call.1} parent=51 // pred_check_branch
          %960 = sbr.rel (%p958) target = $region60
        $region59: #{tpu_custom_call.1} parent=51 // pred_region
          %s961 = sand.u32 %s175, 1
          %s962 = scalar_lea.sflag [#allocation6], %s961
          %s963 = sand.u32 %s175, 1
          %s964 = smul.addr %s963, 2
          %s965 = scalar_lea.vmem [#allocation5], %s964
          %966 = dma.done %s962, 32
        $region60: #{tpu_custom_call.1} parent=51 // pred_fallthru
          _
      $region52: #{tpu_custom_call.1} parent=5 // pred_fallthru
        _
    $region6: #{tpu_custom_call.1} parent=1 // loop_footer
      %s24 = sadd.s32 1, %s20
    $region7: #{tpu_custom_call.1} parent=1 // loop_footer_branch
      %19 = sbr.rel target = $region3
    $region8: #{tpu_custom_call.1} parent=1 // loop_exit
      _
    %967 = vsyncpa [#allocation4], 1
    %s968 = scalar_lea.sflag [#allocation4], 1
    %969 = vsyncpa %s968, 1
    %970 = vsyncpa [#allocation6], 1
    %s971 = scalar_lea.sflag [#allocation6], 1
    %972 = vsyncpa %s971, 1

</llo_original>
